<compile_context>
chip_gen: v6e
topology: v6e:2x2x1
jax: 0.10.0
libtpu: 0.0.40
codegen_flags: <defaults>
</compile_context>

<pallas_src>
import math

import jax
import jax.numpy as jnp
from jax.experimental import pallas as pl
from jax.experimental.pallas import tpu as pltpu


def _round_up(a, b):
    return ((a + b - 1) // b) * b


def _block_diag(blocks):
    """Dense block-diagonal assembly of a list of 2-D arrays (wrapper-side)."""
    rows = sum(int(b.shape[0]) for b in blocks)
    cols = sum(int(b.shape[1]) for b in blocks)
    out = jnp.zeros((rows, cols), blocks[0].dtype)
    r = c = 0
    for b in blocks:
        out = out.at[r:r + b.shape[0], c:c + b.shape[1]].set(b)
        r += int(b.shape[0])
        c += int(b.shape[1])
    return out


def stl_kernel(x_ref, ws_ref, seg_ref, v_ref, o_ref):
    """Fused multi-head style attention for one packed batch tile.

    x_ref  : (Bn, P*ref_dim)     packed queries (P batch rows per lane row)
    ws_ref : (P*ref_dim, P*H*T)  (Wq/sqrt(d_k)) @ K^T, block-diag over heads & P
    seg_ref: (P*H*T, P*H*T)      block-diag ones(T,T): segmented-sum broadcast
    v_ref  : (P*H*T, P*U)        per-head V, block-diag over heads & P
    o_ref  : (Bn, P*U)
    """
    s = jnp.dot(x_ref[...], ws_ref[...], preferred_element_type=jnp.float32)
    # Subtracting any per-row constant leaves every per-segment softmax
    # unchanged, so a single full-row max suffices (no per-segment maxima).
    m = jnp.max(s, axis=-1, keepdims=True)
    e = jnp.exp(s - m)
    denom = jnp.dot(e, seg_ref[...], preferred_element_type=jnp.float32)
    p = e * pl.reciprocal(denom, approx=True)      # EUP vrcp
    o_ref[...] = jnp.dot(p, v_ref[...],
                         preferred_element_type=jnp.float32).astype(o_ref.dtype)


def stl_forward(x, embed, wq, wk, wv, *, num_heads):
    """x: (N, ref_dim). Returns (N, 1, token_dim) like STL.forward."""
    N, ref_dim = x.shape
    T, d_k = embed.shape            # token_num, token_dim // num_heads
    U = wq.shape[1]                 # token_dim (num_units)
    H = num_heads
    ss = U // H
    assert U % H == 0, "num_units must be divisible by num_heads"
    assert wk.shape == (d_k, U) and wv.shape == (d_k, U)

    f32 = jnp.float32
    x = x.astype(f32)

    # ---- batch-invariant key path, hoisted out of the kernel ----------------
    keys = jnp.tanh(embed.astype(f32))                         # (T, d_k)
    k = keys @ wk.astype(f32)                                  # (T, U)
    v = keys @ wv.astype(f32)                                  # (T, U)

    k_h = k.reshape(T, H, ss)                                  # head h -> [:, h, :]
    v_h = v.reshape(T, H, ss)
    kt_bd = _block_diag([k_h[:, h, :].T for h in range(H)])    # (U, H*T)
    v_bd = _block_diag([v_h[:, h, :] for h in range(H)])       # (H*T, U)
    seg = _block_diag([jnp.ones((T, T), f32) for _ in range(H)])  # (H*T, H*T)

    # Query projection, 1/sqrt(d_k) scale and K^T fused into one score matrix.
    w_score = (wq.astype(f32) / math.sqrt(float(d_k))) @ kt_bd  # (ref_dim, H*T)

    # ---- pack P batch rows per 128-lane row ---------------------------------
    P = 128 // U if (U < 128 and 128 % U == 0) else 1
    if P > 1:
        w_score = _block_diag([w_score] * P)     # (P*ref_dim, P*H*T)
        seg = _block_diag([seg] * P)             # (P*H*T, P*H*T)
        v_bd = _block_diag([v_bd] * P)           # (P*H*T, P*U)

    np_rows = pl.cdiv(N, P)                      # packed row count

    # ---- batch tiling -------------------------------------------------------
    if np_rows <= 8:
        block_n = np_rows                        # single full-array block
    else:
        # >=2 grid programs (v7x has 2 TensorCores), tiles a multiple of 8,
        # capped so per-step VMEM stays a few MiB on every generation.
        block_n = min(2048, _round_up(pl.cdiv(np_rows, 2), 8))
    np_pad = _round_up(np_rows, block_n)
    n_pad = np_pad * P

    if n_pad != N:
        x = jnp.zeros((n_pad, ref_dim), f32).at[:N].set(x)
    x_packed = x.reshape(np_pad, P * ref_dim)    # free row-major reshape

    grid = (np_pad // block_n,)

    out_packed = pl.pallas_call(
        stl_kernel,
        out_shape=jax.ShapeDtypeStruct((np_pad, P * U), f32),
        grid=grid,
        in_specs=[
            pl.BlockSpec((block_n, P * ref_dim), lambda i: (i, 0)),    # x: tiled
            pl.BlockSpec((P * ref_dim, P * H * T), lambda i: (0, 0)),  # resident
            pl.BlockSpec((P * H * T, P * H * T), lambda i: (0, 0)),    # resident
            pl.BlockSpec((P * H * T, P * U), lambda i: (0, 0)),        # resident
        ],
        out_specs=pl.BlockSpec((block_n, P * U), lambda i: (i, 0)),
        compiler_params=pltpu.CompilerParams(
            dimension_semantics=("parallel",),
            vmem_limit_bytes=32 * 1024 * 1024,
        ),
    )(x_packed, w_score, seg, v_bd)

    out = out_packed.reshape(n_pad, U)[:N]       # free reshape + slice
    return out[:, None, :]                       # (N, 1, token_dim)


def reference_forward(x, embed, wq, wk, wv, *, num_heads):
    """Pure-JAX reference mirroring the PyTorch code path exactly."""
    N = x.shape[0]
    token_num, d_k = embed.shape
    U = wq.shape[1]

    query = x[:, None, :]                                   # (N, 1, ref_dim)
    keys = jnp.broadcast_to(jnp.tanh(embed)[None], (N, token_num, d_k))

    querys = query @ wq                                     # (N, 1, U)
    keys_p = keys @ wk                                      # (N, T, U)
    values = keys @ wv                                      # (N, T, U)

    def split_heads(t):  # (N, L, U) -> (h, N, L, ss)
        return jnp.stack(jnp.split(t, num_heads, axis=2), axis=0)

    qh, kh, vh = split_heads(querys), split_heads(keys_p), split_heads(values)
    scores = jnp.einsum('hnqd,hnkd->hnqk', qh, kh) / (d_k ** 0.5)
    scores = jax.nn.softmax(scores, axis=3)
    out = jnp.einsum('hnqk,hnkd->hnqd', scores, vh)         # (h, N, 1, ss)
    out = jnp.concatenate(jnp.split(out, num_heads, axis=0), axis=3)[0]  # (N,1,U)
    return out


if __name__ == "__main__":
    # Small, forward-consistent shapes (STL with token_dim=32, 4 heads).
    N = 2            # batch
    ref_dim = 32     # query dim
    num_heads = 4
    token_num = 8
    token_dim = 32   # num_units
    d_k = token_dim // num_heads

    key = jax.random.PRNGKey(0)
    k_embed, k_x, k_wq, k_wk, k_wv = jax.random.split(key, 5)

    # Deterministic parameter init (embed ~ N(0, 0.5) as in the module).
    embed = 0.5 * jax.random.normal(k_embed, (token_num, d_k), jnp.float32)
    # Linear weights stored as (in_dim, out_dim); no bias (bias=False).
    wq = 0.1 * jax.random.normal(k_wq, (ref_dim, token_dim), jnp.float32)
    wk = 0.1 * jax.random.normal(k_wk, (d_k, token_dim), jnp.float32)
    wv = 0.1 * jax.random.normal(k_wv, (d_k, token_dim), jnp.float32)

    x = jax.random.normal(k_x, (N, ref_dim), jnp.float32)

    out = stl_forward(x, embed, wq, wk, wv, num_heads=num_heads)
    out = jax.block_until_ready(out)

    ref = reference_forward(x, embed, wq, wk, wv, num_heads=num_heads)
    assert out.shape == (N, 1, token_dim), out.shape
    # Tolerance accounts for the approximate EUP reciprocal in the softmax
    # denominator and the wrapper-side fusion of Wq with K^T.
    max_err = float(jnp.max(jnp.abs(out - ref)))
    assert jnp.allclose(out, ref, atol=2e-3, rtol=2e-3), max_err

    print("KERNEL_OK")
</pallas_src>

<mosaic_0001>
module attributes {stable_mosaic.version = 11 : i64} {
  func.func @stl_kernel(%arg0: i32, %arg1: memref<1x128xf32, #tpu.memory_space<vmem>>, %arg2: memref<128x128xf32, #tpu.memory_space<vmem>>, %arg3: memref<128x128xf32, #tpu.memory_space<vmem>>, %arg4: memref<128x128xf32, #tpu.memory_space<vmem>>, %arg5: memref<1x128xf32, #tpu.memory_space<vmem>>) attributes {dimension_semantics = [#tpu.dimension_semantics<parallel>], iteration_bounds = array<i64: 1>, scalar_prefetch = 0 : i64, scratch_operands = 0 : i64, tpu.core_type = #tpu.core_type<tc>, window_params = [{transform_indices = @transform_0, window_bounds = array<i64: 1, 128>}, {pipeline_mode = #tpu.pipeline_mode<synchronous>, transform_indices = @transform_1, window_bounds = array<i64: 128, 128>}, {pipeline_mode = #tpu.pipeline_mode<synchronous>, transform_indices = @transform_2, window_bounds = array<i64: 128, 128>}, {pipeline_mode = #tpu.pipeline_mode<synchronous>, transform_indices = @transform_3, window_bounds = array<i64: 128, 128>}, {transform_indices = @transform_4, window_bounds = array<i64: 1, 128>}]} {
    %c0 = arith.constant 0 : index
    %c0_0 = arith.constant 0 : index
    %0 = vector.load %arg1[%c0, %c0_0] : memref<1x128xf32, #tpu.memory_space<vmem>>, vector<1x128xf32>
    %c0_1 = arith.constant 0 : index
    %c0_2 = arith.constant 0 : index
    %1 = vector.load %arg2[%c0_1, %c0_2] : memref<128x128xf32, #tpu.memory_space<vmem>>, vector<128x128xf32>
    %cst = arith.constant dense<0.000000e+00> : vector<1x128xf32>
    %2 = tpu.matmul %0, %1, %cst {dimension_numbers = #tpu.dot_dimension_numbers<[1], [0], [0], [1], [0, 0, 1, 1], [], []>} : vector<1x128xf32>, vector<128x128xf32>, vector<1x128xf32> -> vector<1x128xf32>
    %cst_3 = arith.constant dense<0xFF800000> : vector<1xf32>
    %3 = vector.multi_reduction <maximumf>, %2, %cst_3 [1] : vector<1x128xf32> to vector<1xf32>
    %4 = vector.shape_cast %3 : vector<1xf32> to vector<1x1xf32>
    %5 = vector.broadcast %4 : vector<1x1xf32> to vector<1x128xf32>
    %6 = arith.subf %2, %5 : vector<1x128xf32>
    %7 = math.exp %6 : vector<1x128xf32>
    %c0_4 = arith.constant 0 : index
    %c0_5 = arith.constant 0 : index
    %8 = vector.load %arg3[%c0_4, %c0_5] : memref<128x128xf32, #tpu.memory_space<vmem>>, vector<128x128xf32>
    %cst_6 = arith.constant dense<0.000000e+00> : vector<1x128xf32>
    %9 = tpu.matmul %7, %8, %cst_6 {dimension_numbers = #tpu.dot_dimension_numbers<[1], [0], [0], [1], [0, 0, 1, 1], [], []>} : vector<1x128xf32>, vector<128x128xf32>, vector<1x128xf32> -> vector<1x128xf32>
    %10 = tpu.reciprocal %9 {approx = true} : vector<1x128xf32> -> vector<1x128xf32>
    %11 = arith.mulf %7, %10 : vector<1x128xf32>
    %c0_7 = arith.constant 0 : index
    %c0_8 = arith.constant 0 : index
    %12 = vector.load %arg4[%c0_7, %c0_8] : memref<128x128xf32, #tpu.memory_space<vmem>>, vector<128x128xf32>
    %cst_9 = arith.constant dense<0.000000e+00> : vector<1x128xf32>
    %13 = tpu.matmul %11, %12, %cst_9 {dimension_numbers = #tpu.dot_dimension_numbers<[1], [0], [0], [1], [0, 0, 1, 1], [], []>} : vector<1x128xf32>, vector<128x128xf32>, vector<1x128xf32> -> vector<1x128xf32>
    %c0_10 = arith.constant 0 : index
    %c0_11 = arith.constant 0 : index
    %14 = vector.load %arg5[%c0_10, %c0_11] : memref<1x128xf32, #tpu.memory_space<vmem>>, vector<1x128xf32>
    tpu.vector_store %arg5[%c0_10, %c0_11], %13 {strides = array<i32>} : memref<1x128xf32, #tpu.memory_space<vmem>>, vector<1x128xf32>,
    return
  }
  func.func @transform_0(%arg0: i32) -> (i32, i32) {
    %c0_i32 = arith.constant 0 : i32
    %c0_i32_0 = arith.constant 0 : i32
    return %arg0, %c0_i32 : i32, i32
  }
  func.func @transform_1(%arg0: i32) -> (i32, i32) {
    %c0_i32 = arith.constant 0 : i32
    %c0_i32_0 = arith.constant 0 : i32
    %c0_i32_1 = arith.constant 0 : i32
    return %c0_i32, %c0_i32_0 : i32, i32
  }
  func.func @transform_2(%arg0: i32) -> (i32, i32) {
    %c0_i32 = arith.constant 0 : i32
    %c0_i32_0 = arith.constant 0 : i32
    %c0_i32_1 = arith.constant 0 : i32
    return %c0_i32, %c0_i32_0 : i32, i32
  }
  func.func @transform_3(%arg0: i32) -> (i32, i32) {
    %c0_i32 = arith.constant 0 : i32
    %c0_i32_0 = arith.constant 0 : i32
    %c0_i32_1 = arith.constant 0 : i32
    return %c0_i32, %c0_i32_0 : i32, i32
  }
  func.func @transform_4(%arg0: i32) -> (i32, i32) {
    %c0_i32 = arith.constant 0 : i32
    %c0_i32_0 = arith.constant 0 : i32
    return %arg0, %c0_i32 : i32, i32
  }
}

</mosaic_0001>

<llo_original>
// kernel: tpu_custom_call.1
$region0: #{tpu_custom_call.1}
  #allocation0 [shape = 'u32[]', space=smem, size = 0x4, offset = 0x4, fixed_abs, tag = 'smem constant byte address 0x4 - core index']
  #allocation1 [shape = 'u32[144,128]{1,0:T(1,128)}', space=vmem, size = 0x12000, scoped, tag = 'internal scratch']
  %s0 = inlined_call_operand.hbm [shape: f32[1,128], index: 0, kind: input, shape index: {}]
  %s1 = inlined_call_operand.hbm [shape: f32[128,128], index: 1, kind: input, shape index: {}]
  %s2 = inlined_call_operand.hbm [shape: f32[128,128], index: 2, kind: input, shape index: {}]
  %s3 = inlined_call_operand.hbm [shape: f32[128,128], index: 3, kind: input, shape index: {}]
  %s4 = inlined_call_operand.hbm [shape: f32[1,128], index: 4, kind: output, shape index: {}]
  %s5 = sld [smem:[#allocation0]]
  $region42: #{tpu_custom_call.1} parent=0
    _
  %s7 = ssub.s32 1, %s5
  %s8 = scalar_select 0, %s7, %s5
  $region1: #{tpu_custom_call.1} parent=0
    #allocation2 [shape = 'u8[512]{0}', space=vmem, size = 0x400, scoped, tag = 'input window, operand 0, single buffered']
    #allocation3 [shape = 's32[1]{0}', space=sflag, size = 0x4, scoped, tag = 'scoped memory for tpu_custom_call.1']
    #allocation4 [shape = 's32[1]{0}', space=sflag, size = 0x4, scoped, tag = 'scoped memory for tpu_custom_call.1']
    #allocation5 [shape = 'u8[65536]{0}', space=vmem, size = 0x10000, scoped, tag = 'input window, operand 1, single buffered']
    #allocation6 [shape = 's32[1]{0}', space=sflag, size = 0x4, scoped, tag = 'scoped memory for tpu_custom_call.1']
    #allocation7 [shape = 'u8[65536]{0}', space=vmem, size = 0x10000, scoped, tag = 'input window, operand 2, single buffered']
    #allocation8 [shape = 'u8[65536]{0}', space=vmem, size = 0x10000, scoped, tag = 'input window, operand 3, single buffered']
    #allocation9 [shape = 's32[1]{0}', space=sflag, size = 0x4, scoped, tag = 'scoped memory for tpu_custom_call.1']
    #allocation10 [shape = 'u8[512]{0}', space=vmem, size = 0x400, scoped, tag = 'output window, operand 0, single buffered']
    %9 = vsyncpa [#allocation3], 0
    %10 = vsyncpa [#allocation6], 0
    %11 = vsyncpa [#allocation9], 0
    %12 = vsyncpa [#allocation4], 0
    // Predicated region
    $region2: #{tpu_custom_call.1} parent=1 // pred_check
      _
    $region3: #{tpu_custom_call.1} parent=1 // pred_check_branch
      %14 = sbr.rel (0) target = $region5
    $region4: #{tpu_custom_call.1} parent=1 // pred_region
      %s16 = ssub.s32 16, 16
      %17 = vsyncadd [#allocation3], %s16
      %s19 = sshll.u32 [#allocation2], 4
      %s20 = int_to_ptr.vmem [resolvable:$true] %s19
      %22 = dma.hbm_to_vmem [thread:$0]  %s0, 16, %s20, [#allocation3]
    $region5: #{tpu_custom_call.1} parent=1 // pred_fallthru
      _
    // Predicated region
    $region6: #{tpu_custom_call.1} parent=1 // pred_check
      _
    $region7: #{tpu_custom_call.1} parent=1 // pred_check_branch
      %24 = sbr.rel (0) target = $region9
    $region8: #{tpu_custom_call.1} parent=1 // pred_region
      %s26 = ssub.s32 2048, 2048
      %27 = vsyncadd [#allocation6], %s26
      %s28 = sshll.u32 [#allocation5], 4
      %s29 = int_to_ptr.vmem [resolvable:$true] %s28
      %34 = dma.hbm_to_vmem [thread:$0]  %s1, 2048, %s29, [#allocation6], 128, 128, 8
    $region9: #{tpu_custom_call.1} parent=1 // pred_fallthru
      _
    // Predicated region
    $region10: #{tpu_custom_call.1} parent=1 // pred_check
      _
    $region11: #{tpu_custom_call.1} parent=1 // pred_check_branch
      %36 = sbr.rel (0) target = $region13
    $region12: #{tpu_custom_call.1} parent=1 // pred_region
      %s38 = ssub.s32 2048, 2048
      %39 = vsyncadd [#allocation6], %s38
      %s40 = sshll.u32 [#allocation7], 4
      %s41 = int_to_ptr.vmem [resolvable:$true] %s40
      %46 = dma.hbm_to_vmem [thread:$0]  %s2, 2048, %s41, [#allocation6], 128, 128, 8
    $region13: #{tpu_custom_call.1} parent=1 // pred_fallthru
      _
    // Predicated region
    $region14: #{tpu_custom_call.1} parent=1 // pred_check
      _
    $region15: #{tpu_custom_call.1} parent=1 // pred_check_branch
      %48 = sbr.rel (0) target = $region17
    $region16: #{tpu_custom_call.1} parent=1 // pred_region
      %s50 = ssub.s32 2048, 2048
      %51 = vsyncadd [#allocation9], %s50
      %s52 = sshll.u32 [#allocation8], 4
      %s53 = int_to_ptr.vmem [resolvable:$true] %s52
      %58 = dma.hbm_to_vmem [thread:$0]  %s3, 2048, %s53, [#allocation9], 128, 128, 8
    $region17: #{tpu_custom_call.1} parent=1 // pred_fallthru
      _
    // Predicated region
    $region18: #{tpu_custom_call.1} parent=1 // pred_check
      _
    $region19: #{tpu_custom_call.1} parent=1 // pred_check_branch
      %60 = sbr.rel (0) target = $region21
    $region20: #{tpu_custom_call.1} parent=1 // pred_region
      %61 = dma.done [#allocation3], 16
    $region21: #{tpu_custom_call.1} parent=1 // pred_fallthru
      _
    // Predicated region
    $region22: #{tpu_custom_call.1} parent=1 // pred_check
      _
    $region23: #{tpu_custom_call.1} parent=1 // pred_check_branch
      %63 = sbr.rel (0) target = $region25
    $region24: #{tpu_custom_call.1} parent=1 // pred_region
      %64 = dma.done [#allocation6], 2048
    $region25: #{tpu_custom_call.1} parent=1 // pred_fallthru
      _
    // Predicated region
    $region26: #{tpu_custom_call.1} parent=1 // pred_check
      _
    $region27: #{tpu_custom_call.1} parent=1 // pred_check_branch
      %66 = sbr.rel (0) target = $region29
    $region28: #{tpu_custom_call.1} parent=1 // pred_region
      %67 = dma.done [#allocation6], 2048
    $region29: #{tpu_custom_call.1} parent=1 // pred_fallthru
      _
    // Predicated region
    $region30: #{tpu_custom_call.1} parent=1 // pred_check
      _
    $region31: #{tpu_custom_call.1} parent=1 // pred_check_branch
      %69 = sbr.rel (0) target = $region33
    $region32: #{tpu_custom_call.1} parent=1 // pred_region
      %70 = dma.done [#allocation9], 2048
    $region33: #{tpu_custom_call.1} parent=1 // pred_fallthru
      _
    %v71 = vld [vmem:[#allocation2] sm:$0x1]
    %v72 = vld [vmem:[#allocation5] sm:$0xff]
    %v73 = vld [vmem:[#allocation5 + $0x8] sm:$0xff]
    %v74 = vld [vmem:[#allocation5 + $0x10] sm:$0xff]
    %v75 = vld [vmem:[#allocation5 + $0x18] sm:$0xff]
    %v76 = vld [vmem:[#allocation5 + $0x20] sm:$0xff]
    %v77 = vld [vmem:[#allocation5 + $0x28] sm:$0xff]
    %v78 = vld [vmem:[#allocation5 + $0x30] sm:$0xff]
    %v79 = vld [vmem:[#allocation5 + $0x38] sm:$0xff]
    %v80 = vld [vmem:[#allocation5 + $0x40] sm:$0xff]
    %v81 = vld [vmem:[#allocation5 + $0x48] sm:$0xff]
    %v82 = vld [vmem:[#allocation5 + $0x50] sm:$0xff]
    %v83 = vld [vmem:[#allocation5 + $0x58] sm:$0xff]
    %v84 = vld [vmem:[#allocation5 + $0x60] sm:$0xff]
    %v85 = vld [vmem:[#allocation5 + $0x68] sm:$0xff]
    %v86 = vld [vmem:[#allocation5 + $0x70] sm:$0xff]
    %v87 = vld [vmem:[#allocation5 + $0x78] sm:$0xff]
    %88 = vmatprep.subr.mxu0 0.0
    %89 = vmatpush1.msra.mxu0 %v87
    %90 = vmatprep.subr.mxu0 0.0
    %91 = vmatpush1.msra.mxu0 %v86
    %92 = vmatprep.subr.mxu0 0.0
    %93 = vmatpush1.msra.mxu0 %v85
    %94 = vmatprep.subr.mxu0 0.0
    %95 = vmatpush1.msra.mxu0 %v84
    %96 = vmatprep.subr.mxu0 0.0
    %97 = vmatpush1.msra.mxu0 %v83
    %98 = vmatprep.subr.mxu0 0.0
    %99 = vmatpush1.msra.mxu0 %v82
    %100 = vmatprep.subr.mxu0 0.0
    %101 = vmatpush1.msra.mxu0 %v81
    %102 = vmatprep.subr.mxu0 0.0
    %103 = vmatpush1.msra.mxu0 %v80
    %104 = vmatprep.subr.mxu0 0.0
    %105 = vmatpush1.msra.mxu0 %v79
    %106 = vmatprep.subr.mxu0 0.0
    %107 = vmatpush1.msra.mxu0 %v78
    %108 = vmatprep.subr.mxu0 0.0
    %109 = vmatpush1.msra.mxu0 %v77
    %110 = vmatprep.subr.mxu0 0.0
    %111 = vmatpush1.msra.mxu0 %v76
    %112 = vmatprep.subr.mxu0 0.0
    %113 = vmatpush1.msra.mxu0 %v75
    %114 = vmatprep.subr.mxu0 0.0
    %115 = vmatpush1.msra.mxu0 %v74
    %116 = vmatprep.subr.mxu0 0.0
    %117 = vmatpush1.msra.mxu0 %v73
    %118 = vmatprep.subr.mxu0 0.0
    %119 = vmatpush1.msra.mxu0 %v72
    %120 = vmatprep.subr.mxu0 0.0
    %121 = vmatpush2.msra.mxu0 0.0
    %122 = vmatprep.subr.mxu0 0.0
    %123 = vmatpush2.msra.mxu0 0.0
    %124 = vmatprep.subr.mxu0 0.0
    %125 = vmatpush2.msra.mxu0 0.0
    %126 = vmatprep.subr.mxu0 0.0
    %127 = vmatpush2.msra.mxu0 0.0
    %128 = vmatprep.subr.mxu0 0.0
    %129 = vmatpush2.msra.mxu0 0.0
    %130 = vmatprep.subr.mxu0 0.0
    %131 = vmatpush2.msra.mxu0 0.0
    %132 = vmatprep.subr.mxu0 0.0
    %133 = vmatpush2.msra.mxu0 0.0
    %134 = vmatprep.subr.mxu0 0.0
    %135 = vmatpush2.msra.mxu0 0.0
    %136 = vmatprep.subr.mxu0 0.0
    %137 = vmatpush2.msra.mxu0 0.0
    %138 = vmatprep.subr.mxu0 0.0
    %139 = vmatpush2.msra.mxu0 0.0
    %140 = vmatprep.subr.mxu0 0.0
    %141 = vmatpush2.msra.mxu0 0.0
    %142 = vmatprep.subr.mxu0 0.0
    %143 = vmatpush2.msra.mxu0 0.0
    %144 = vmatprep.subr.mxu0 0.0
    %145 = vmatpush2.msra.mxu0 0.0
    %146 = vmatprep.subr.mxu0 0.0
    %147 = vmatpush2.msra.mxu0 0.0
    %148 = vmatprep.subr.mxu0 0.0
    %149 = vmatpush2.msra.mxu0 0.0
    %150 = vmatprep.subr.mxu0 0.0
    %151 = vmatpush2.msra.mxu0 0.0
    %152 = vmatprep.mubr.f32.mxu0 0.0
    %153 = vmatmul.mubr.f32.gmra.mxu0 %v71
    %v154 = vpop.f32.mrf.mxu0
    %v155 = vadd.f32 0.0, %v154
    %v156 = vpop.f32.mrf.mxu0
    %157 = vdwg.mxu0
    %vm158 = vcmask 1040384
    %v159 = vsel %vm158, %v155, -inf
    %160 = vmax.xlane.f32.xlu0 %v159
    %v161 = vpop.xlane.xlu0 %160
    %v162 = vsub.f32 %v155, %v161
    %v163 = vmul.f32 %v162, 1.442695
    %v164 = vpow.pop %v163
    %v165 = vld [vmem:[#allocation7] sm:$0xff]
    %v166 = vld [vmem:[#allocation7 + $0x8] sm:$0xff]
    %v167 = vld [vmem:[#allocation7 + $0x10] sm:$0xff]
    %v168 = vld [vmem:[#allocation7 + $0x18] sm:$0xff]
    %v169 = vld [vmem:[#allocation7 + $0x20] sm:$0xff]
    %v170 = vld [vmem:[#allocation7 + $0x28] sm:$0xff]
    %v171 = vld [vmem:[#allocation7 + $0x30] sm:$0xff]
    %v172 = vld [vmem:[#allocation7 + $0x38] sm:$0xff]
    %v173 = vld [vmem:[#allocation7 + $0x40] sm:$0xff]
    %v174 = vld [vmem:[#allocation7 + $0x48] sm:$0xff]
    %v175 = vld [vmem:[#allocation7 + $0x50] sm:$0xff]
    %v176 = vld [vmem:[#allocation7 + $0x58] sm:$0xff]
    %v177 = vld [vmem:[#allocation7 + $0x60] sm:$0xff]
    %v178 = vld [vmem:[#allocation7 + $0x68] sm:$0xff]
    %v179 = vld [vmem:[#allocation7 + $0x70] sm:$0xff]
    %v180 = vld [vmem:[#allocation7 + $0x78] sm:$0xff]
    %181 = vmatprep.subr.mxu0 0.0
    %182 = vmatpush1.msra.mxu0 %v180
    %183 = vmatprep.subr.mxu0 0.0
    %184 = vmatpush1.msra.mxu0 %v179
    %185 = vmatprep.subr.mxu0 0.0
    %186 = vmatpush1.msra.mxu0 %v178
    %187 = vmatprep.subr.mxu0 0.0
    %188 = vmatpush1.msra.mxu0 %v177
    %189 = vmatprep.subr.mxu0 0.0
    %190 = vmatpush1.msra.mxu0 %v176
    %191 = vmatprep.subr.mxu0 0.0
    %192 = vmatpush1.msra.mxu0 %v175
    %193 = vmatprep.subr.mxu0 0.0
    %194 = vmatpush1.msra.mxu0 %v174
    %195 = vmatprep.subr.mxu0 0.0
    %196 = vmatpush1.msra.mxu0 %v173
    %197 = vmatprep.subr.mxu0 0.0
    %198 = vmatpush1.msra.mxu0 %v172
    %199 = vmatprep.subr.mxu0 0.0
    %200 = vmatpush1.msra.mxu0 %v171
    %201 = vmatprep.subr.mxu0 0.0
    %202 = vmatpush1.msra.mxu0 %v170
    %203 = vmatprep.subr.mxu0 0.0
    %204 = vmatpush1.msra.mxu0 %v169
    %205 = vmatprep.subr.mxu0 0.0
    %206 = vmatpush1.msra.mxu0 %v168
    %207 = vmatprep.subr.mxu0 0.0
    %208 = vmatpush1.msra.mxu0 %v167
    %209 = vmatprep.subr.mxu0 0.0
    %210 = vmatpush1.msra.mxu0 %v166
    %211 = vmatprep.subr.mxu0 0.0
    %212 = vmatpush1.msra.mxu0 %v165
    %213 = vmatprep.subr.mxu0 0.0
    %214 = vmatpush2.msra.mxu0 0.0
    %215 = vmatprep.subr.mxu0 0.0
    %216 = vmatpush2.msra.mxu0 0.0
    %217 = vmatprep.subr.mxu0 0.0
    %218 = vmatpush2.msra.mxu0 0.0
    %219 = vmatprep.subr.mxu0 0.0
    %220 = vmatpush2.msra.mxu0 0.0
    %221 = vmatprep.subr.mxu0 0.0
    %222 = vmatpush2.msra.mxu0 0.0
    %223 = vmatprep.subr.mxu0 0.0
    %224 = vmatpush2.msra.mxu0 0.0
    %225 = vmatprep.subr.mxu0 0.0
    %226 = vmatpush2.msra.mxu0 0.0
    %227 = vmatprep.subr.mxu0 0.0
    %228 = vmatpush2.msra.mxu0 0.0
    %229 = vmatprep.subr.mxu0 0.0
    %230 = vmatpush2.msra.mxu0 0.0
    %231 = vmatprep.subr.mxu0 0.0
    %232 = vmatpush2.msra.mxu0 0.0
    %233 = vmatprep.subr.mxu0 0.0
    %234 = vmatpush2.msra.mxu0 0.0
    %235 = vmatprep.subr.mxu0 0.0
    %236 = vmatpush2.msra.mxu0 0.0
    %237 = vmatprep.subr.mxu0 0.0
    %238 = vmatpush2.msra.mxu0 0.0
    %239 = vmatprep.subr.mxu0 0.0
    %240 = vmatpush2.msra.mxu0 0.0
    %241 = vmatprep.subr.mxu0 0.0
    %242 = vmatpush2.msra.mxu0 0.0
    %243 = vmatprep.subr.mxu0 0.0
    %244 = vmatpush2.msra.mxu0 0.0
    %245 = vmatprep.mubr.f32.mxu0 0.0
    %246 = vmatmul.mubr.f32.gmra.mxu0 %v164
    %v247 = vpop.f32.mrf.mxu0
    %v248 = vadd.f32 0.0, %v247
    %v249 = vpop.f32.mrf.mxu0
    %250 = vdwg.mxu0
    %v251 = vrcp.pop %v248
    %v252 = vmul.f32 %v164, %v251
    %v253 = vld [vmem:[#allocation8] sm:$0xff]
    %v254 = vld [vmem:[#allocation8 + $0x8] sm:$0xff]
    %v255 = vld [vmem:[#allocation8 + $0x10] sm:$0xff]
    %v256 = vld [vmem:[#allocation8 + $0x18] sm:$0xff]
    %v257 = vld [vmem:[#allocation8 + $0x20] sm:$0xff]
    %v258 = vld [vmem:[#allocation8 + $0x28] sm:$0xff]
    %v259 = vld [vmem:[#allocation8 + $0x30] sm:$0xff]
    %v260 = vld [vmem:[#allocation8 + $0x38] sm:$0xff]
    %v261 = vld [vmem:[#allocation8 + $0x40] sm:$0xff]
    %v262 = vld [vmem:[#allocation8 + $0x48] sm:$0xff]
    %v263 = vld [vmem:[#allocation8 + $0x50] sm:$0xff]
    %v264 = vld [vmem:[#allocation8 + $0x58] sm:$0xff]
    %v265 = vld [vmem:[#allocation8 + $0x60] sm:$0xff]
    %v266 = vld [vmem:[#allocation8 + $0x68] sm:$0xff]
    %v267 = vld [vmem:[#allocation8 + $0x70] sm:$0xff]
    %v268 = vld [vmem:[#allocation8 + $0x78] sm:$0xff]
    %269 = vmatprep.subr.mxu0 0.0
    %270 = vmatpush1.msra.mxu0 %v268
    %271 = vmatprep.subr.mxu0 0.0
    %272 = vmatpush1.msra.mxu0 %v267
    %273 = vmatprep.subr.mxu0 0.0
    %274 = vmatpush1.msra.mxu0 %v266
    %275 = vmatprep.subr.mxu0 0.0
    %276 = vmatpush1.msra.mxu0 %v265
    %277 = vmatprep.subr.mxu0 0.0
    %278 = vmatpush1.msra.mxu0 %v264
    %279 = vmatprep.subr.mxu0 0.0
    %280 = vmatpush1.msra.mxu0 %v263
    %281 = vmatprep.subr.mxu0 0.0
    %282 = vmatpush1.msra.mxu0 %v262
    %283 = vmatprep.subr.mxu0 0.0
    %284 = vmatpush1.msra.mxu0 %v261
    %285 = vmatprep.subr.mxu0 0.0
    %286 = vmatpush1.msra.mxu0 %v260
    %287 = vmatprep.subr.mxu0 0.0
    %288 = vmatpush1.msra.mxu0 %v259
    %289 = vmatprep.subr.mxu0 0.0
    %290 = vmatpush1.msra.mxu0 %v258
    %291 = vmatprep.subr.mxu0 0.0
    %292 = vmatpush1.msra.mxu0 %v257
    %293 = vmatprep.subr.mxu0 0.0
    %294 = vmatpush1.msra.mxu0 %v256
    %295 = vmatprep.subr.mxu0 0.0
    %296 = vmatpush1.msra.mxu0 %v255
    %297 = vmatprep.subr.mxu0 0.0
    %298 = vmatpush1.msra.mxu0 %v254
    %299 = vmatprep.subr.mxu0 0.0
    %300 = vmatpush1.msra.mxu0 %v253
    %301 = vmatprep.subr.mxu0 0.0
    %302 = vmatpush2.msra.mxu0 0.0
    %303 = vmatprep.subr.mxu0 0.0
    %304 = vmatpush2.msra.mxu0 0.0
    %305 = vmatprep.subr.mxu0 0.0
    %306 = vmatpush2.msra.mxu0 0.0
    %307 = vmatprep.subr.mxu0 0.0
    %308 = vmatpush2.msra.mxu0 0.0
    %309 = vmatprep.subr.mxu0 0.0
    %310 = vmatpush2.msra.mxu0 0.0
    %311 = vmatprep.subr.mxu0 0.0
    %312 = vmatpush2.msra.mxu0 0.0
    %313 = vmatprep.subr.mxu0 0.0
    %314 = vmatpush2.msra.mxu0 0.0
    %315 = vmatprep.subr.mxu0 0.0
    %316 = vmatpush2.msra.mxu0 0.0
    %317 = vmatprep.subr.mxu0 0.0
    %318 = vmatpush2.msra.mxu0 0.0
    %319 = vmatprep.subr.mxu0 0.0
    %320 = vmatpush2.msra.mxu0 0.0
    %321 = vmatprep.subr.mxu0 0.0
    %322 = vmatpush2.msra.mxu0 0.0
    %323 = vmatprep.subr.mxu0 0.0
    %324 = vmatpush2.msra.mxu0 0.0
    %325 = vmatprep.subr.mxu0 0.0
    %326 = vmatpush2.msra.mxu0 0.0
    %327 = vmatprep.subr.mxu0 0.0
    %328 = vmatpush2.msra.mxu0 0.0
    %329 = vmatprep.subr.mxu0 0.0
    %330 = vmatpush2.msra.mxu0 0.0
    %331 = vmatprep.subr.mxu0 0.0
    %332 = vmatpush2.msra.mxu0 0.0
    %333 = vmatprep.mubr.f32.mxu0 0.0
    %334 = vmatmul.mubr.f32.gmra.mxu0 %v252
    %v335 = vpop.f32.mrf.mxu0
    %v336 = vadd.f32 0.0, %v335
    %v337 = vpop.f32.mrf.mxu0
    %338 = vdwg.mxu0
    %339 = vst [vmem:[#allocation10] sm:$0x1] %v336
    // Predicated region
    $region34: #{tpu_custom_call.1} parent=1 // pred_check
      _
    $region35: #{tpu_custom_call.1} parent=1 // pred_check_branch
      %341 = sbr.rel (0) target = $region37
    $region36: #{tpu_custom_call.1} parent=1 // pred_region
      %s343 = ssub.s32 16, 16
      %344 = vsyncadd [#allocation4], %s343
      %s346 = sshll.u32 [#allocation10], 4
      %s347 = int_to_ptr.vmem [resolvable:$true] %s346
      %349 = dma.vmem_to_hbm [thread:$0]  %s347, 16, %s4, [#allocation4]
    $region37: #{tpu_custom_call.1} parent=1 // pred_fallthru
      _
    // Predicated region
    $region38: #{tpu_custom_call.1} parent=1 // pred_check
      _
    $region39: #{tpu_custom_call.1} parent=1 // pred_check_branch
      %351 = sbr.rel (0) target = $region41
    $region40: #{tpu_custom_call.1} parent=1 // pred_region
      %352 = dma.done [#allocation4], 16
    $region41: #{tpu_custom_call.1} parent=1 // pred_fallthru
      _
    %353 = vsyncpa [#allocation3], 1
    %354 = vsyncpa [#allocation6], 1
    %355 = vsyncpa [#allocation9], 1
    %356 = vsyncpa [#allocation4], 1

</llo_original>
